<compile_context>
chip_gen: v5e
topology: v5e:2x2
jax: 0.10.0
libtpu: 0.0.40
codegen_flags: <defaults>
</compile_context>

<pallas_src>
import functools

import jax
import jax.numpy as jnp
from jax.experimental import pallas as pl
from jax.experimental.pallas import tpu as pltpu

_EPS = 1e-5
_LANE = 128
_VMEM = pl.BlockSpec(memory_space=pltpu.MemorySpace.VMEM)  # full array in VMEM


def _rup(x, m):
    return ((x + m - 1) // m) * m


# --------------------------------------------------------------------------
# Pass 1: tiled matmul (bf16 -> f32 acc) + per-channel sum / sumsq partials
# --------------------------------------------------------------------------
def _matmul_stats_kernel(x_ref, w_ref, y_ref, st_ref, acc_ref):
    k = pl.program_id(1)

    @pl.when(k == 0)
    def _init():
        acc_ref[...] = jnp.zeros_like(acc_ref)

    acc_ref[...] += jnp.dot(x_ref[...], w_ref[...],
                            preferred_element_type=jnp.float32)

    @pl.when(k == pl.num_programs(1) - 1)
    def _finalize():
        y = acc_ref[...]
        y_ref[...] = y
        o = y.shape[1]
        s = jnp.broadcast_to(jnp.sum(y, axis=0, keepdims=True), (8, o))
        q = jnp.broadcast_to(jnp.sum(y * y, axis=0, keepdims=True), (8, o))
        rows = jax.lax.broadcasted_iota(jnp.int32, (8, o), 0)
        # rows 0..3 hold the channel sum, rows 4..7 the channel sum-of-squares
        st_ref[...] = jnp.where(rows < 4, s, q)[None]


def _matmul_stats(x_bf16, w_bf16, *, tm, tk):
    mp, kp = x_bf16.shape
    op = w_bf16.shape[1]
    n_m, n_k = mp // tm, kp // tk

    flops = 2 * mp * kp * op
    bytes_accessed = mp * kp * 2 + n_m * kp * op * 2 + mp * op * 4 + n_m * 8 * op * 4

    grid_spec = pltpu.PrefetchScalarGridSpec(
        num_scalar_prefetch=0,
        grid=(n_m, n_k),
        in_specs=[
            pl.BlockSpec((tm, tk), lambda i, k: (i, k)),
            pl.BlockSpec((tk, op), lambda i, k: (k, 0)),
        ],
        out_specs=[
            pl.BlockSpec((tm, op), lambda i, k: (i, 0)),
            pl.BlockSpec((1, 8, op), lambda i, k: (i, 0, 0)),
        ],
        scratch_shapes=[pltpu.VMEM((tm, op), jnp.float32)],
    )
    y, st = pl.pallas_call(
        _matmul_stats_kernel,
        out_shape=(jax.ShapeDtypeStruct((mp, op), jnp.float32),
                   jax.ShapeDtypeStruct((n_m, 8, op), jnp.float32)),
        grid_spec=grid_spec,
        compiler_params=pltpu.CompilerParams(
            dimension_semantics=("parallel", "arbitrary"),
            vmem_limit_bytes=32 * 1024 * 1024),
        cost_estimate=pl.CostEstimate(flops=flops, transcendentals=0,
                                      bytes_accessed=bytes_accessed),
    )(x_bf16, w_bf16)
    return y, st


# --------------------------------------------------------------------------
# Pass 2: tiled normalize (folded scale/shift) + residual + ReLU
# --------------------------------------------------------------------------
def _bn_apply_kernel(y_ref, sc_ref, sh_ref, o_ref, *, relu):
    out = y_ref[...] * sc_ref[...] + sh_ref[...]
    if relu:
        out = jnp.maximum(out, 0.0)
    o_ref[...] = out


def _bn_apply_res_kernel(y_ref, sc_ref, sh_ref, r_ref, o_ref, *, relu):
    out = y_ref[...] * sc_ref[...] + sh_ref[...] + r_ref[...]
    if relu:
        out = jnp.maximum(out, 0.0)
    o_ref[...] = out


def _bn_apply(y, scale, shift, *, tm, relu, residual=None):
    mp, op = y.shape
    n_m = mp // tm
    sc = scale.reshape(1, op).astype(jnp.float32)
    sh = shift.reshape(1, op).astype(jnp.float32)

    in_specs = [
        pl.BlockSpec((tm, op), lambda i: (i, 0)),
        pl.BlockSpec((1, op), lambda i: (0, 0)),
        pl.BlockSpec((1, op), lambda i: (0, 0)),
    ]
    args = [y, sc, sh]
    if residual is None:
        kern = functools.partial(_bn_apply_kernel, relu=relu)
    else:
        in_specs.append(pl.BlockSpec((tm, op), lambda i: (i, 0)))
        args.append(residual)
        kern = functools.partial(_bn_apply_res_kernel, relu=relu)

    return pl.pallas_call(
        kern,
        out_shape=jax.ShapeDtypeStruct((mp, op), jnp.float32),
        grid=(n_m,),
        in_specs=in_specs,
        out_specs=pl.BlockSpec((tm, op), lambda i: (i, 0)),
        compiler_params=pltpu.CompilerParams(
            dimension_semantics=("parallel",)),
    )(*args)


# --------------------------------------------------------------------------
# conv (im2col matmul) + training-mode BatchNorm (+residual)(+ReLU)
# --------------------------------------------------------------------------
def conv_bn(patches, w2d, gamma, beta, *, relu, residual=None):
    """patches:(M,K) act rows; w2d:(Kp,Op) bf16, K<=Kp; gamma/beta:(Op,).
    Returns (M, Op) f32.  BN uses batch statistics over the true M rows."""
    m_true, k = patches.shape
    kp, op = w2d.shape

    tm = min(256, _rup(m_true, 8))
    mp = _rup(m_true, tm)

    x = patches.astype(jnp.bfloat16)
    if mp != m_true or kp != k:
        x = jnp.pad(x, ((0, mp - m_true), (0, kp - k)))   # zero rows/cols: no effect on stats

    if kp <= 2304:
        tk = kp
    else:
        tk = 2304
        while kp % tk:
            tk -= _LANE

    y, st = _matmul_stats(x, w2d, tm=tm, tk=tk)

    # tiny per-channel glue: reduce per-tile partials, fold BN into scale/shift
    ch_sum = jnp.sum(st[:, 0, :], axis=0)
    ch_sq = jnp.sum(st[:, 4, :], axis=0)
    mean = ch_sum / m_true
    var = jnp.maximum(ch_sq / m_true - mean * mean, 0.0)
    scale = gamma * jax.lax.rsqrt(var + _EPS)
    shift = beta - mean * scale

    res = residual
    if res is not None:
        res = res.astype(jnp.float32)
        if mp != m_true:
            res = jnp.pad(res, ((0, mp - m_true), (0, 0)))

    out = _bn_apply(y, scale, shift, tm=tm, relu=relu, residual=res)
    return out[:m_true] if mp != m_true else out


def _im2col_3x3(x, stride):
    """NHWC -> (N*Ho*Wo, 9*C) bf16 patches (padding=1), kernel-pos major."""
    n, h, w, c = x.shape
    ho = (h + 2 - 3) // stride + 1
    wo = (w + 2 - 3) // stride + 1
    xb = x.astype(jnp.bfloat16)
    xp = jnp.pad(xb, ((0, 0), (1, 1), (1, 1), (0, 0)))
    cols = []
    for di in range(3):
        for dj in range(3):
            cols.append(
                jax.lax.slice(
                    xp,
                    (0, di, dj, 0),
                    (n, di + (ho - 1) * stride + 1, dj + (wo - 1) * stride + 1, c),
                    (1, stride, stride, 1),
                )
            )
    patches = jnp.stack(cols, axis=3)                # (N,Ho,Wo,9,C)
    return patches.reshape(n * ho * wo, 9 * c), (n, ho, wo)


def conv3x3_bn(x, w2d, gamma, beta, *, stride, relu, residual=None):
    patches, (n, ho, wo) = _im2col_3x3(x, stride)
    op = w2d.shape[1]
    res2d = None if residual is None else residual.reshape(n * ho * wo, op)
    out = conv_bn(patches, w2d, gamma, beta, relu=relu, residual=res2d)
    return out.reshape(n, ho, wo, op)


def conv1x1_bn(x, w2d, gamma, beta, *, stride):
    xs = x[:, ::stride, ::stride, :]
    n, ho, wo, c = xs.shape
    out = conv_bn(xs.reshape(n * ho * wo, c), w2d, gamma, beta, relu=False)
    return out.reshape(n, ho, wo, w2d.shape[1])


# --------------------------------------------------------------------------
# MaxPool 3x3 / stride 2 / pad 1 — kernel writes only the strided output.
# Even/odd-plane decomposition keeps all in-kernel slices contiguous.
# --------------------------------------------------------------------------
def _maxpool_kernel(ee_ref, eo_ref, oe_ref, oo_ref, o_ref, *, Ho, Wo):
    ee = ee_ref[...]
    eo = eo_ref[...]
    oe = oe_ref[...]
    oo = oo_ref[...]
    m = ee[:, :Ho, :Wo, :]
    m = jnp.maximum(m, ee[:, :Ho, 1:, :])
    m = jnp.maximum(m, ee[:, 1:, :Wo, :])
    m = jnp.maximum(m, ee[:, 1:, 1:, :])
    m = jnp.maximum(m, eo[:, :Ho, :, :])
    m = jnp.maximum(m, eo[:, 1:, :, :])
    m = jnp.maximum(m, oe[:, :, :Wo, :])
    m = jnp.maximum(m, oe[:, :, 1:, :])
    m = jnp.maximum(m, oo)
    o_ref[...] = m


def maxpool_3x3_s2_p1(x):
    n, h, w, c = x.shape
    ho = (h - 1) // 2 + 1
    wo = (w - 1) // 2 + 1
    neg = jnp.finfo(jnp.float32).min
    xp = jnp.pad(x, ((0, 0), (1, 1), (1, 1), (0, 0)), constant_values=neg)
    ee = xp[:, 0:2 * ho + 1:2, 0:2 * wo + 1:2, :]   # (N, Ho+1, Wo+1, C)
    eo = xp[:, 0:2 * ho + 1:2, 1:2 * wo + 1:2, :]   # (N, Ho+1, Wo,   C)
    oe = xp[:, 1:2 * ho:2, 0:2 * wo + 1:2, :]       # (N, Ho,   Wo+1, C)
    oo = xp[:, 1:2 * ho:2, 1:2 * wo + 1:2, :]       # (N, Ho,   Wo,   C)
    return pl.pallas_call(
        functools.partial(_maxpool_kernel, Ho=ho, Wo=wo),
        out_shape=jax.ShapeDtypeStruct((n, ho, wo, c), jnp.float32),
        in_specs=[_VMEM] * 4,
        out_specs=_VMEM,
    )(ee, eo, oe, oo)


# --------------------------------------------------------------------------
# Global average pool + FC
# --------------------------------------------------------------------------
def _avgpool_fc_kernel(x_ref, w_ref, b_ref, o_ref):
    feat = jnp.mean(x_ref[...], axis=1)
    o_ref[...] = jnp.dot(feat, w_ref[...], preferred_element_type=jnp.float32) + b_ref[...]


def avgpool_fc(x, w, b):
    n, h, w_sp, c = x.shape
    xr = x.reshape(n, h * w_sp, c)
    return pl.pallas_call(
        _avgpool_fc_kernel,
        out_shape=jax.ShapeDtypeStruct((n, w.shape[1]), jnp.float32),
        in_specs=[_VMEM] * 3,
        out_specs=_VMEM,
    )(xr, w, b.reshape(1, -1))


# --------------------------------------------------------------------------
# Parameters (deterministic, synthetic; matches nn.Module shapes, lane-padded)
# --------------------------------------------------------------------------
def _make_conv_w2d(key, ksize, cin, cout, cin_act):
    """HWIO weight, cin padded to the activation channel count, cout padded to
    a multiple of 128, flattened to (rup(k*k*cin_act,128), cout_p) bf16."""
    cout_p = _rup(cout, _LANE)
    std = (2.0 / (ksize * ksize * cin)) ** 0.5
    w = std * jax.random.normal(key, (ksize, ksize, cin, cout), jnp.float32)
    w = jnp.pad(w, ((0, 0), (0, 0), (0, cin_act - cin), (0, cout_p - cout)))
    w2d = w.reshape(ksize * ksize * cin_act, cout_p)
    kp = _rup(w2d.shape[0], _LANE)
    w2d = jnp.pad(w2d, ((0, kp - w2d.shape[0]), (0, 0)))
    return w2d.astype(jnp.bfloat16)


def _bn_params(c, c_pad):
    gamma = jnp.pad(jnp.ones((c,), jnp.float32), (0, c_pad - c))
    beta = jnp.zeros((c_pad,), jnp.float32)
    return gamma, beta


def init_params(key, num_block_list=(2, 2, 2, 2), num_classes=10):
    keys = iter(jax.random.split(key, 64))
    p = {}

    c1p = _rup(64, _LANE)
    p["conv1_w"] = _make_conv_w2d(next(keys), 3, 3, 64, cin_act=3)
    p["bn1_g"], p["bn1_b"] = _bn_params(64, c1p)

    in_planes, in_act = 64, c1p
    layers = []
    for planes, nblocks, stride0 in zip((64, 128, 256, 512), num_block_list, (1, 2, 2, 2)):
        planes_p = _rup(planes, _LANE)
        blocks = []
        for bi in range(nblocks):
            s = stride0 if bi == 0 else 1
            blk = {"stride": s, "in_planes": in_planes, "planes": planes}
            blk["conv1_w"] = _make_conv_w2d(next(keys), 3, in_planes, planes, cin_act=in_act)
            blk["bn1_g"], blk["bn1_b"] = _bn_params(planes, planes_p)
            blk["conv2_w"] = _make_conv_w2d(next(keys), 3, planes, planes, cin_act=planes_p)
            blk["bn2_g"], blk["bn2_b"] = _bn_params(planes, planes_p)
            if s != 1 or in_planes != planes:
                blk["sc_w"] = _make_conv_w2d(next(keys), 1, in_planes, planes, cin_act=in_act)
                blk["sc_bn_g"], blk["sc_bn_b"] = _bn_params(planes, planes_p)
            blocks.append(blk)
            in_planes, in_act = planes, planes_p
        layers.append(blocks)
    p["layers"] = layers

    final_c, final_cp = 512, _rup(512, _LANE)
    fc_w = (512.0 ** -0.5) * jax.random.normal(next(keys), (final_c, num_classes), jnp.float32)
    p["fc_w"] = jnp.pad(fc_w, ((0, final_cp - final_c), (0, 0)))
    p["fc_b"] = jnp.zeros((num_classes,), jnp.float32)
    return p


# --------------------------------------------------------------------------
# Forward pass (mirrors ResNet.forward / BasicBlock.forward, BN in train mode)
# --------------------------------------------------------------------------
def basic_block(x, p):
    stride = p["stride"]
    out = conv3x3_bn(x, p["conv1_w"], p["bn1_g"], p["bn1_b"], stride=stride, relu=True)
    if stride != 1 or p["in_planes"] != p["planes"]:
        sc = conv1x1_bn(x, p["sc_w"], p["sc_bn_g"], p["sc_bn_b"], stride=stride)
    else:
        sc = x
    # bn2 + residual add + ReLU fused in the normalize pass
    out = conv3x3_bn(out, p["conv2_w"], p["bn2_g"], p["bn2_b"],
                     stride=1, relu=True, residual=sc)
    return out


def resnet_forward(x_nchw, params):
    x = jnp.transpose(x_nchw, (0, 2, 3, 1)).astype(jnp.float32)   # NCHW -> NHWC
    x = conv3x3_bn(x, params["conv1_w"], params["bn1_g"], params["bn1_b"],
                   stride=1, relu=True)
    x = maxpool_3x3_s2_p1(x)
    for layer in params["layers"]:
        for blk in layer:
            x = basic_block(x, blk)
    return avgpool_fc(x, params["fc_w"], params["fc_b"])           # (N, num_classes)


# --------------------------------------------------------------------------
if __name__ == "__main__":
    key = jax.random.PRNGKey(0)
    k_x, k_p = jax.random.split(key)
    x = jax.random.normal(k_x, (2, 3, 16, 16), jnp.float32)        # NCHW like PyTorch
    params = init_params(k_p)

    logits = resnet_forward(x, params)
    jax.block_until_ready(logits)
    assert logits.shape == (2, 10) and logits.dtype == jnp.float32
    assert bool(jnp.all(jnp.isfinite(logits)))
    print("KERNEL_OK")
</pallas_src>

<mosaic_0001>
module attributes {stable_mosaic.version = 11 : i64} {
  func.func @_matmul_stats_kernel(%arg0: i32, %arg1: i32, %arg2: memref<256x128xbf16, #tpu.memory_space<vmem>>, %arg3: memref<128x128xbf16, #tpu.memory_space<vmem>>, %arg4: memref<256x128xf32, #tpu.memory_space<vmem>>, %arg5: memref<1x8x128xf32, #tpu.memory_space<vmem>>, %arg6: memref<256x128xf32, #tpu.memory_space<vmem>>) attributes {dimension_semantics = [#tpu.dimension_semantics<parallel>, #tpu.dimension_semantics<arbitrary>], iteration_bounds = array<i64: 2, 1>, scalar_prefetch = 0 : i64, scratch_operands = 1 : i64, tpu.core_type = #tpu.core_type<tc>, window_params = [{transform_indices = @transform_0, window_bounds = array<i64: 256, 128>}, {transform_indices = @transform_1, window_bounds = array<i64: 128, 128>}, {transform_indices = @transform_2, window_bounds = array<i64: 256, 128>}, {transform_indices = @transform_3, window_bounds = array<i64: 1, 8, 128>}]} {
    %c0_i32 = arith.constant 0 : i32
    %0 = arith.cmpi eq, %arg1, %c0_i32 : i32
    %1 = arith.extui %0 : i1 to i32
    %c0_i32_0 = arith.constant 0 : i32
    %2 = arith.cmpi ne, %1, %c0_i32_0 : i32
    scf.if %2 {
      %cst_10 = arith.constant 0.000000e+00 : f32
      %12 = vector.broadcast %cst_10 : f32 to vector<256x128xf32>
      %c0_11 = arith.constant 0 : index
      %c0_12 = arith.constant 0 : index
      %13 = vector.load %arg6[%c0_11, %c0_12] : memref<256x128xf32, #tpu.memory_space<vmem>>, vector<256x128xf32>
      tpu.vector_store %arg6[%c0_11, %c0_12], %12 {strides = array<i32>} : memref<256x128xf32, #tpu.memory_space<vmem>>, vector<256x128xf32>,
    } else {
    }
    %c0 = arith.constant 0 : index
    %c0_1 = arith.constant 0 : index
    %3 = vector.load %arg6[%c0, %c0_1] : memref<256x128xf32, #tpu.memory_space<vmem>>, vector<256x128xf32>
    %c0_2 = arith.constant 0 : index
    %c0_3 = arith.constant 0 : index
    %4 = vector.load %arg2[%c0_2, %c0_3] : memref<256x128xbf16, #tpu.memory_space<vmem>>, vector<256x128xbf16>
    %c0_4 = arith.constant 0 : index
    %c0_5 = arith.constant 0 : index
    %5 = vector.load %arg3[%c0_4, %c0_5] : memref<128x128xbf16, #tpu.memory_space<vmem>>, vector<128x128xbf16>
    %cst = arith.constant dense<0.000000e+00> : vector<256x128xf32>
    %6 = tpu.matmul %4, %5, %cst {dimension_numbers = #tpu.dot_dimension_numbers<[1], [0], [0], [1], [0, 0, 1, 1], [], []>} : vector<256x128xbf16>, vector<128x128xbf16>, vector<256x128xf32> -> vector<256x128xf32>
    %7 = arith.addf %3, %6 : vector<256x128xf32>
    %c0_6 = arith.constant 0 : index
    %c0_7 = arith.constant 0 : index
    %8 = vector.load %arg6[%c0_6, %c0_7] : memref<256x128xf32, #tpu.memory_space<vmem>>, vector<256x128xf32>
    tpu.vector_store %arg6[%c0_6, %c0_7], %7 {strides = array<i32>} : memref<256x128xf32, #tpu.memory_space<vmem>>, vector<256x128xf32>,
    %c0_i32_8 = arith.constant 0 : i32
    %9 = arith.cmpi eq, %arg1, %c0_i32_8 : i32
    %10 = arith.extui %9 : i1 to i32
    %c0_i32_9 = arith.constant 0 : i32
    %11 = arith.cmpi ne, %10, %c0_i32_9 : i32
    scf.if %11 {
      %c0_10 = arith.constant 0 : index
      %c0_11 = arith.constant 0 : index
      %12 = vector.load %arg6[%c0_10, %c0_11] : memref<256x128xf32, #tpu.memory_space<vmem>>, vector<256x128xf32>
      %c0_12 = arith.constant 0 : index
      %c0_13 = arith.constant 0 : index
      %13 = vector.load %arg4[%c0_12, %c0_13] : memref<256x128xf32, #tpu.memory_space<vmem>>, vector<256x128xf32>
      tpu.vector_store %arg4[%c0_12, %c0_13], %12 {strides = array<i32>} : memref<256x128xf32, #tpu.memory_space<vmem>>, vector<256x128xf32>,
      %cst_14 = arith.constant dense<0.000000e+00> : vector<128xf32>
      %14 = vector.multi_reduction <add>, %12, %cst_14 [0] : vector<256x128xf32> to vector<128xf32>
      %15 = vector.shape_cast %14 : vector<128xf32> to vector<1x128xf32>
      %16 = vector.shape_cast %15 : vector<1x128xf32> to vector<1x128xf32>
      %17 = vector.broadcast %16 : vector<1x128xf32> to vector<8x128xf32>
      %18 = arith.mulf %12, %12 : vector<256x128xf32>
      %cst_15 = arith.constant dense<0.000000e+00> : vector<128xf32>
      %19 = vector.multi_reduction <add>, %18, %cst_15 [0] : vector<256x128xf32> to vector<128xf32>
      %20 = vector.shape_cast %19 : vector<128xf32> to vector<1x128xf32>
      %21 = vector.shape_cast %20 : vector<1x128xf32> to vector<1x128xf32>
      %22 = vector.broadcast %21 : vector<1x128xf32> to vector<8x128xf32>
      %23 = tpu.iota {dimensions = array<i32: 0>} : vector<8x128xi32>
      %c4_i32 = arith.constant 4 : i32
      %24 = vector.broadcast %c4_i32 : i32 to vector<8x128xi32>
      %25 = arith.cmpi slt, %23, %24 : vector<8x128xi32>
      %26 = arith.select %25, %17, %22 : vector<8x128xi1>, vector<8x128xf32>
      %27 = vector.shape_cast %26 : vector<8x128xf32> to vector<1x8x128xf32>
      %c0_16 = arith.constant 0 : index
      %c0_17 = arith.constant 0 : index
      %c0_18 = arith.constant 0 : index
      %28 = vector.load %arg5[%c0_16, %c0_17, %c0_18] : memref<1x8x128xf32, #tpu.memory_space<vmem>>, vector<1x8x128xf32>
      tpu.vector_store %arg5[%c0_16, %c0_17, %c0_18], %27 {strides = array<i32>} : memref<1x8x128xf32, #tpu.memory_space<vmem>>, vector<1x8x128xf32>,
    } else {
    }
    return
  }
  func.func @transform_0(%arg0: i32, %arg1: i32) -> (i32, i32) {
    %c0_i32 = arith.constant 0 : i32
    return %arg0, %arg1 : i32, i32
  }
  func.func @transform_1(%arg0: i32, %arg1: i32) -> (i32, i32) {
    %c0_i32 = arith.constant 0 : i32
    %c0_i32_0 = arith.constant 0 : i32
    return %arg1, %c0_i32 : i32, i32
  }
  func.func @transform_2(%arg0: i32, %arg1: i32) -> (i32, i32) {
    %c0_i32 = arith.constant 0 : i32
    %c0_i32_0 = arith.constant 0 : i32
    return %arg0, %c0_i32 : i32, i32
  }
  func.func @transform_3(%arg0: i32, %arg1: i32) -> (i32, i32, i32) {
    %c0_i32 = arith.constant 0 : i32
    %c0_i32_0 = arith.constant 0 : i32
    %c0_i32_1 = arith.constant 0 : i32
    return %arg0, %c0_i32, %c0_i32_0 : i32, i32, i32
  }
}

</mosaic_0001>

<llo_original>
// kernel: tpu_custom_call.1
$region0: #{tpu_custom_call.1}
  #allocation0 [shape = 'u32[]', space=smem, size = 0x4, offset = 0x4, fixed_abs, tag = 'smem constant byte address 0x4 - core index']
  #allocation1 [shape = 'u32[72,128]{1,0:T(1,128)}', space=vmem, size = 0x9000, scoped, tag = 'internal scratch']
  #allocation2 [shape = 'f32[256,128]{1,0:T(8,128)}', space=vmem, size = 0x20000, scoped, tag = 'scratch operand']
  %s0 = inlined_call_operand.hbm [shape: bf16[512,128], index: 0, kind: input, shape index: {}]
  %s1 = inlined_call_operand.hbm [shape: bf16[128,128], index: 1, kind: input, shape index: {}]
  %s2 = inlined_call_operand.hbm [shape: f32[512,128], index: 2, kind: output, shape index: {0}]
  %s3 = inlined_call_operand.hbm [shape: f32[2,8,128], index: 3, kind: output, shape index: {1}]
  %4 = xla_tuple %s2, %s3
  %s5 = sld [smem:[#allocation0]]
  $region65: #{tpu_custom_call.1} parent=0
    _
  %s7 = ssub.s32 1, %s5
  %s8 = scalar_select 0, %s7, %s5
  $region1: #{tpu_custom_call.1} parent=0
    #allocation3 [shape = 'u8[131072]{0}', space=vmem, size = 0x20000, scoped, tag = 'input window, operand 0']
    #allocation4 [shape = 's32[2]{0}', space=sflag, size = 0x8, scoped, tag = 'scoped memory for tpu_custom_call.1']
    #allocation5 [shape = 's32[2]{0}', space=sflag, size = 0x8, scoped, tag = 'scoped memory for tpu_custom_call.1']
    #allocation6 [shape = 'u8[32768]{0}', space=vmem, size = 0x8000, scoped, tag = 'input window, operand 1, single buffered']
    #allocation7 [shape = 's32[1]{0}', space=sflag, size = 0x4, scoped, tag = 'scoped memory for tpu_custom_call.1']
    #allocation8 [shape = 'u8[262144]{0}', space=vmem, size = 0x40000, scoped, tag = 'output window, operand 0']
    #allocation9 [shape = 'u8[8192]{0}', space=vmem, size = 0x2000, scoped, tag = 'output window, operand 1']
    #allocation10 [shape = 's32[2]{0}', space=sflag, size = 0x8, scoped, tag = 'scoped memory for tpu_custom_call.1']
    %9 = vsyncpa [#allocation4], 0
    %s10 = scalar_lea.sflag [#allocation4], 1
    %11 = vsyncpa %s10, 0
    %12 = vsyncpa [#allocation7], 0
    %13 = vsyncpa [#allocation5], 0
    %s14 = scalar_lea.sflag [#allocation5], 1
    %15 = vsyncpa %s14, 0
    %16 = vsyncpa [#allocation10], 0
    %s17 = scalar_lea.sflag [#allocation10], 1
    %18 = vsyncpa %s17, 0
    loop: start=0, step=1, limit=4
    $region2: #{tpu_custom_call.1} parent=1 // loop_pre_header
      _
    $region3: #{tpu_custom_call.1} parent=1 // loop_header
      %s20 = sphi 0, %s24
      %p21 = scmp.ge.s32.totalorder %s20, 4
      %s27 = sphi 0, %s39
      %s28 = sphi 0, %s35
      %s29 = sphi 0, %s27
      %s30 = sphi 0, %s28
      %s31 = sphi 0, %s29
      %s32 = sphi 0, %s30
      %s44 = sphi 0, %s46
      %s47 = sphi 0, %s44
      %s48 = sphi 0, %s47
      %s64 = sphi 0, %s48
      %s70 = sphi 0, %s72
      %s73 = sphi 0, %s70
      %s74 = sphi 0, %s73
      %s90 = sphi 0, %s74
      %s96 = sphi 0, %s98
      %s99 = sphi 0, %s96
      %s100 = sphi 0, %s99
      %s116 = sphi 0, %s100
      %s122 = sphi 0, %s124
      %s125 = sphi 0, %s122
      %s126 = sphi 0, %s125
      %s142 = sphi 0, %s126
    $region4: #{tpu_custom_call.1} parent=1 // loop_header_branch
      %23 = sbr.rel (%p21) target = $region8
    $region5: #{tpu_custom_call.1} parent=1 // loop_body
      %s25 = ssub.s32 %s20, 1
      %s26 = ssub.s32 %s20, 2
      %s33 = sadd.s32 1, %s28
      %p34 = scmp.ge.s32.totalorder %s33, 1
      %s35 = scalar_select %p34, 0, %s33
      %s36 = sadd.s32 1, %s27
      %s37 = scalar_select %p34, %s36, %s27
      %p38 = scmp.ge.s32.totalorder %s37, 2
      %s39 = scalar_select %p38, 0, %s37
      %s40 = ssub.s32 %s27, %s39
      %s41 = ssub.s32 %s28, %s35
      %s42 = sor.u32 %s40, %s41
      %p43 = scmp.eq.s32.totalorder %s42, 0
      %s45 = sadd.s32 %s44, 1
      %s46 = scalar_select %p43, %s44, %s45
      %p49 = pneg %p43
      %p50 = scmp.eq.s32.totalorder %s20, 1
      %p51 = por %p49, %p50
      %p52 = scmp.ne.s32.totalorder %s44, %s47
      %p53 = scmp.eq.s32.totalorder %s20, 0
      %p54 = por %p52, %p53
      %p55 = scmp.ne.s32.totalorder %s44, %s47
      %p56 = scmp.eq.s32.totalorder %s25, 1
      %p57 = por %p55, %p56
      %p58 = scmp.ne.s32.totalorder %s47, %s48
      %p59 = scmp.eq.s32.totalorder %s25, 0
      %p60 = por %p58, %p59
      %p61 = scmp.ne.s32.totalorder %s47, %s48
      %p62 = scmp.eq.s32.totalorder %s26, 1
      %p63 = por %p61, %p62
      %p65 = scmp.ne.s32.totalorder %s48, %s64
      %p66 = scmp.eq.s32.totalorder %s26, 0
      %p67 = por %p65, %p66
      %s68 = ssub.s32 %s28, %s35
      %p69 = scmp.eq.s32.totalorder %s68, 0
      %s71 = sadd.s32 %s70, 1
      %s72 = scalar_select %p69, %s70, %s71
      %p75 = pneg %p69
      %p76 = scmp.eq.s32.totalorder %s20, 1
      %p77 = por %p75, %p76
      %p78 = scmp.ne.s32.totalorder %s70, %s73
      %p79 = scmp.eq.s32.totalorder %s20, 0
      %p80 = por %p78, %p79
      %p81 = scmp.ne.s32.totalorder %s70, %s73
      %p82 = scmp.eq.s32.totalorder %s25, 1
      %p83 = por %p81, %p82
      %p84 = scmp.ne.s32.totalorder %s73, %s74
      %p85 = scmp.eq.s32.totalorder %s25, 0
      %p86 = por %p84, %p85
      %p87 = scmp.ne.s32.totalorder %s73, %s74
      %p88 = scmp.eq.s32.totalorder %s26, 1
      %p89 = por %p87, %p88
      %p91 = scmp.ne.s32.totalorder %s74, %s90
      %p92 = scmp.eq.s32.totalorder %s26, 0
      %p93 = por %p91, %p92
      %s94 = ssub.s32 %s27, %s39
      %p95 = scmp.eq.s32.totalorder %s94, 0
      %s97 = sadd.s32 %s96, 1
      %s98 = scalar_select %p95, %s96, %s97
      %p101 = pneg %p95
      %p102 = scmp.eq.s32.totalorder %s20, 1
      %p103 = por %p101, %p102
      %p104 = scmp.ne.s32.totalorder %s96, %s99
      %p105 = scmp.eq.s32.totalorder %s20, 0
      %p106 = por %p104, %p105
      %p107 = scmp.ne.s32.totalorder %s96, %s99
      %p108 = scmp.eq.s32.totalorder %s25, 1
      %p109 = por %p107, %p108
      %p110 = scmp.ne.s32.totalorder %s99, %s100
      %p111 = scmp.eq.s32.totalorder %s25, 0
      %p112 = por %p110, %p111
      %p113 = scmp.ne.s32.totalorder %s99, %s100
      %p114 = scmp.eq.s32.totalorder %s26, 1
      %p115 = por %p113, %p114
      %p117 = scmp.ne.s32.totalorder %s100, %s116
      %p118 = scmp.eq.s32.totalorder %s26, 0
      %p119 = por %p117, %p118
      %s120 = ssub.s32 %s27, %s39
      %p121 = scmp.eq.s32.totalorder %s120, 0
      %s123 = sadd.s32 %s122, 1
      %s124 = scalar_select %p121, %s122, %s123
      %p127 = pneg %p121
      %p128 = scmp.eq.s32.totalorder %s20, 1
      %p129 = por %p127, %p128
      %p130 = scmp.ne.s32.totalorder %s122, %s125
      %p131 = scmp.eq.s32.totalorder %s20, 0
      %p132 = por %p130, %p131
      %p133 = scmp.ne.s32.totalorder %s122, %s125
      %p134 = scmp.eq.s32.totalorder %s25, 1
      %p135 = por %p133, %p134
      %p136 = scmp.ne.s32.totalorder %s125, %s126
      %p137 = scmp.eq.s32.totalorder %s25, 0
      %p138 = por %p136, %p137
      %p139 = scmp.ne.s32.totalorder %s125, %s126
      %p140 = scmp.eq.s32.totalorder %s26, 1
      %p141 = por %p139, %p140
      %p143 = scmp.ne.s32.totalorder %s126, %s142
      %p144 = scmp.eq.s32.totalorder %s26, 0
      %p145 = por %p143, %p144
      %p146 = scmp.le.s32.totalorder 1, %s20
      %p147 = scmp.lt.s32.totalorder %s20, 3
      %p148 = pnand %p146, %p147
      %p149 = pneg %p148
      // Predicated region
      $region9: #{tpu_custom_call.1} parent=5 // pred_check
        _
      $region10: #{tpu_custom_call.1} parent=5 // pred_check_branch
        %151 = sbr.rel (%p148) target = $region12
      $region11: #{tpu_custom_call.1} parent=5 // pred_region
        %s152 = ssub.s32 %s20, 1
        // Predicated region
        $region13: #{tpu_custom_call.1} parent=11 // pred_check
          %p153 = pneg %p86
        $region14: #{tpu_custom_call.1} parent=11 // pred_check_branch
          %155 = sbr.rel (%p153) target = $region16
        $region15: #{tpu_custom_call.1} parent=11 // pred_region
          %s156 = smul.u32 16, %s30
          %158 = vsyncadd [#allocation7], 0
          %s159 = smul.addr %s156, 4
          %s160 = scalar_lea.hbm %s1, %s159
          %s161 = sshll.u32 %s160, 4
          %s162 = int_to_ptr.hbm [resolvable:$true] %s161
          %s163 = sshll.u32 [#allocation6], 4
          %s164 = int_to_ptr.vmem [resolvable:$true] %s163
          %169 = dma.hbm_to_vmem [thread:$0]  %s162, 1024, %s164, [#allocation7], 64, 64, 4
        $region16: #{tpu_custom_call.1} parent=11 // pred_fallthru
          _
      $region12: #{tpu_custom_call.1} parent=5 // pred_fallthru
        _
      %p170 = scmp.lt.s32.totalorder %s20, 2
      // Predicated region
      $region17: #{tpu_custom_call.1} parent=5 // pred_check
        %p171 = pneg %p170
      $region18: #{tpu_custom_call.1} parent=5 // pred_check_branch
        %173 = sbr.rel (%p171) target = $region20
      $region19: #{tpu_custom_call.1} parent=5 // pred_region
        // Predicated region
        $region21: #{tpu_custom_call.1} parent=19 // pred_check
          %p174 = pneg %p54
        $region22: #{tpu_custom_call.1} parent=19 // pred_check_branch
          %176 = sbr.rel (%p174) target = $region24
        $region23: #{tpu_custom_call.1} parent=19 // pred_region
          %s177 = sand.u32 %s44, 1
          %s178 = scalar_lea.sflag [#allocation4], %s177
          %s179 = sand.u32 %s44, 1
          %s180 = smul.addr %s179, 128
          %s181 = scalar_lea.vmem [#allocation3], %s180
          %s182 = smul.u32 32, %s27
          %184 = vsyncadd %s178, 0
          %s185 = sadd.s32 %s28, %s182
          %s186 = smul.addr %s185, 4
          %s187 = scalar_lea.hbm %s0, %s186
          %s188 = sshll.u32 %s187, 4
          %s189 = int_to_ptr.hbm [resolvable:$true] %s188
          %s190 = sshll.u32 %s181, 4
          %s191 = int_to_ptr.vmem [resolvable:$true] %s190
          %196 = dma.hbm_to_vmem [thread:$0]  %s189, 2048, %s191, %s178, 64, 64, 4
        $region24: #{tpu_custom_call.1} parent=19 // pred_fallthru
          _
      $region20: #{tpu_custom_call.1} parent=5 // pred_fallthru
        _
      %p197 = scmp.le.s32.totalorder 1, %s20
      %p198 = scmp.lt.s32.totalorder %s20, 3
      %p199 = pnand %p197, %p198
      %p200 = pneg %p199
      // Predicated region
      $region25: #{tpu_custom_call.1} parent=5 // pred_check
        _
      $region26: #{tpu_custom_call.1} parent=5 // pred_check_branch
        %202 = sbr.rel (%p199) target = $region28
      $region27: #{tpu_custom_call.1} parent=5 // pred_region
        %s203 = ssub.s32 %s20, 1
        %s204 = sand.u32 %s47, 1
        %s205 = scalar_lea.sflag [#allocation4], %s204
        %s206 = sand.u32 %s47, 1
        %s207 = smul.addr %s206, 128
        %s208 = scalar_lea.vmem [#allocation3], %s207
        // Predicated region
        $region29: #{tpu_custom_call.1} parent=27 // pred_check
          %p209 = pneg %p60
        $region30: #{tpu_custom_call.1} parent=27 // pred_check_branch
          %211 = sbr.rel (%p209) target = $region32
        $region31: #{tpu_custom_call.1} parent=27 // pred_region
          %213 = dma.done %s205, 2048
        $region32: #{tpu_custom_call.1} parent=27 // pred_fallthru
          _
        // Predicated region
        $region33: #{tpu_custom_call.1} parent=27 // pred_check
          %p214 = pneg %p86
        $region34: #{tpu_custom_call.1} parent=27 // pred_check_branch
          %216 = sbr.rel (%p214) target = $region36
        $region35: #{tpu_custom_call.1} parent=27 // pred_region
          %218 = dma.done [#allocation7], 1024
        $region36: #{tpu_custom_call.1} parent=27 // pred_fallthru
          _
        %s219 = sand.u32 %s47, 1
        %s220 = scalar_lea.sflag [#allocation4], %s219
        %s221 = sand.u32 %s47, 1
        %s222 = smul.addr %s221, 128
        %s223 = scalar_lea.vmem [#allocation3], %s222
        %p224 = pneg %p60
        %p225 = pneg %p57
        %p226 = pneg %p86
        %p227 = pneg %p83
        %p228 = pneg %p112
        %p229 = pneg %p109
        %s230 = sand.u32 %s99, 1
        %s231 = scalar_lea.sflag [#allocation5], %s230
        %s232 = sand.u32 %s99, 1
        %s233 = smul.addr %s232, 256
        %s234 = scalar_lea.vmem [#allocation8], %s233
        %p235 = pneg %p138
        %p236 = pneg %p135
        %s237 = sand.u32 %s125, 1
        %s238 = scalar_lea.sflag [#allocation10], %s237
        %s239 = sand.u32 %s125, 1
        %s240 = smul.addr %s239, 8
        %s241 = scalar_lea.vmem [#allocation9], %s240
        %s242 = smul.u32 32, %s29
        %s243 = smul.u32 16, %s30
        %s244 = smul.u32 32, %s29
        %p245 = scmp.eq.s32.totalorder %s30, 0
        // Predicated region
        $region37: #{tpu_custom_call.1} parent=27 // pred_check
          %p246 = pneg %p245
        $region38: #{tpu_custom_call.1} parent=27 // pred_check_branch
          %248 = sbr.rel (%p246) target = $region40
        $region39: #{tpu_custom_call.1} parent=27 // pred_region
          %249 = vst [vmem:[#allocation2] sm:$0xff] 0.0
          %250 = vst [vmem:[#allocation2 + $0x8] sm:$0xff] 0.0
          %251 = vst [vmem:[#allocation2 + $0x10] sm:$0xff] 0.0
          %252 = vst [vmem:[#allocation2 + $0x18] sm:$0xff] 0.0
          %253 = vst [vmem:[#allocation2 + $0x20] sm:$0xff] 0.0
          %254 = vst [vmem:[#allocation2 + $0x28] sm:$0xff] 0.0
          %255 = vst [vmem:[#allocation2 + $0x30] sm:$0xff] 0.0
          %256 = vst [vmem:[#allocation2 + $0x38] sm:$0xff] 0.0
          %257 = vst [vmem:[#allocation2 + $0x40] sm:$0xff] 0.0
          %258 = vst [vmem:[#allocation2 + $0x48] sm:$0xff] 0.0
          %259 = vst [vmem:[#allocation2 + $0x50] sm:$0xff] 0.0
          %260 = vst [vmem:[#allocation2 + $0x58] sm:$0xff] 0.0
          %261 = vst [vmem:[#allocation2 + $0x60] sm:$0xff] 0.0
          %262 = vst [vmem:[#allocation2 + $0x68] sm:$0xff] 0.0
          %263 = vst [vmem:[#allocation2 + $0x70] sm:$0xff] 0.0
          %264 = vst [vmem:[#allocation2 + $0x78] sm:$0xff] 0.0
          %265 = vst [vmem:[#allocation2 + $0x80] sm:$0xff] 0.0
          %266 = vst [vmem:[#allocation2 + $0x88] sm:$0xff] 0.0
          %267 = vst [vmem:[#allocation2 + $0x90] sm:$0xff] 0.0
          %268 = vst [vmem:[#allocation2 + $0x98] sm:$0xff] 0.0
          %269 = vst [vmem:[#allocation2 + $0xa0] sm:$0xff] 0.0
          %270 = vst [vmem:[#allocation2 + $0xa8] sm:$0xff] 0.0
          %271 = vst [vmem:[#allocation2 + $0xb0] sm:$0xff] 0.0
          %272 = vst [vmem:[#allocation2 + $0xb8] sm:$0xff] 0.0
          %273 = vst [vmem:[#allocation2 + $0xc0] sm:$0xff] 0.0
          %274 = vst [vmem:[#allocation2 + $0xc8] sm:$0xff] 0.0
          %275 = vst [vmem:[#allocation2 + $0xd0] sm:$0xff] 0.0
          %276 = vst [vmem:[#allocation2 + $0xd8] sm:$0xff] 0.0
          %277 = vst [vmem:[#allocation2 + $0xe0] sm:$0xff] 0.0
          %278 = vst [vmem:[#allocation2 + $0xe8] sm:$0xff] 0.0
          %279 = vst [vmem:[#allocation2 + $0xf0] sm:$0xff] 0.0
          %280 = vst [vmem:[#allocation2 + $0xf8] sm:$0xff] 0.0
        $region40: #{tpu_custom_call.1} parent=27 // pred_fallthru
          _
        %v281 = vld [vmem:[#allocation2] sm:$0xff]
        %v282 = vld [vmem:[#allocation2 + $0x8] sm:$0xff]
        %v283 = vld [vmem:[#allocation2 + $0x10] sm:$0xff]
        %v284 = vld [vmem:[#allocation2 + $0x18] sm:$0xff]
        %v285 = vld [vmem:[#allocation2 + $0x20] sm:$0xff]
        %v286 = vld [vmem:[#allocation2 + $0x28] sm:$0xff]
        %v287 = vld [vmem:[#allocation2 + $0x30] sm:$0xff]
        %v288 = vld [vmem:[#allocation2 + $0x38] sm:$0xff]
        %v289 = vld [vmem:[#allocation2 + $0x40] sm:$0xff]
        %v290 = vld [vmem:[#allocation2 + $0x48] sm:$0xff]
        %v291 = vld [vmem:[#allocation2 + $0x50] sm:$0xff]
        %v292 = vld [vmem:[#allocation2 + $0x58] sm:$0xff]
        %v293 = vld [vmem:[#allocation2 + $0x60] sm:$0xff]
        %v294 = vld [vmem:[#allocation2 + $0x68] sm:$0xff]
        %v295 = vld [vmem:[#allocation2 + $0x70] sm:$0xff]
        %v296 = vld [vmem:[#allocation2 + $0x78] sm:$0xff]
        %v297 = vld [vmem:[#allocation2 + $0x80] sm:$0xff]
        %v298 = vld [vmem:[#allocation2 + $0x88] sm:$0xff]
        %v299 = vld [vmem:[#allocation2 + $0x90] sm:$0xff]
        %v300 = vld [vmem:[#allocation2 + $0x98] sm:$0xff]
        %v301 = vld [vmem:[#allocation2 + $0xa0] sm:$0xff]
        %v302 = vld [vmem:[#allocation2 + $0xa8] sm:$0xff]
        %v303 = vld [vmem:[#allocation2 + $0xb0] sm:$0xff]
        %v304 = vld [vmem:[#allocation2 + $0xb8] sm:$0xff]
        %v305 = vld [vmem:[#allocation2 + $0xc0] sm:$0xff]
        %v306 = vld [vmem:[#allocation2 + $0xc8] sm:$0xff]
        %v307 = vld [vmem:[#allocation2 + $0xd0] sm:$0xff]
        %v308 = vld [vmem:[#allocation2 + $0xd8] sm:$0xff]
        %v309 = vld [vmem:[#allocation2 + $0xe0] sm:$0xff]
        %v310 = vld [vmem:[#allocation2 + $0xe8] sm:$0xff]
        %v311 = vld [vmem:[#allocation2 + $0xf0] sm:$0xff]
        %v312 = vld [vmem:[#allocation2 + $0xf8] sm:$0xff]
        %v313 = vld [vmem:[%s208] sm:$0xf]
        %v314 = vld [vmem:[%s208 + $0x4] sm:$0xf]
        %v315 = vld [vmem:[%s208 + $0x8] sm:$0xf]
        %v316 = vld [vmem:[%s208 + $0xc] sm:$0xf]
        %v317 = vld [vmem:[%s208 + $0x10] sm:$0xf]
        %v318 = vld [vmem:[%s208 + $0x14] sm:$0xf]
        %v319 = vld [vmem:[%s208 + $0x18] sm:$0xf]
        %v320 = vld [vmem:[%s208 + $0x1c] sm:$0xf]
        %v321 = vld [vmem:[%s208 + $0x20] sm:$0xf]
        %v322 = vld [vmem:[%s208 + $0x24] sm:$0xf]
        %v323 = vld [vmem:[%s208 + $0x28] sm:$0xf]
        %v324 = vld [vmem:[%s208 + $0x2c] sm:$0xf]
        %v325 = vld [vmem:[%s208 + $0x30] sm:$0xf]
        %v326 = vld [vmem:[%s208 + $0x34] sm:$0xf]
        %v327 = vld [vmem:[%s208 + $0x38] sm:$0xf]
        %v328 = vld [vmem:[%s208 + $0x3c] sm:$0xf]
        %v329 = vld [vmem:[%s208 + $0x40] sm:$0xf]
        %v330 = vld [vmem:[%s208 + $0x44] sm:$0xf]
        %v331 = vld [vmem:[%s208 + $0x48] sm:$0xf]
        %v332 = vld [vmem:[%s208 + $0x4c] sm:$0xf]
        %v333 = vld [vmem:[%s208 + $0x50] sm:$0xf]
        %v334 = vld [vmem:[%s208 + $0x54] sm:$0xf]
        %v335 = vld [vmem:[%s208 + $0x58] sm:$0xf]
        %v336 = vld [vmem:[%s208 + $0x5c] sm:$0xf]
        %v337 = vld [vmem:[%s208 + $0x60] sm:$0xf]
        %v338 = vld [vmem:[%s208 + $0x64] sm:$0xf]
        %v339 = vld [vmem:[%s208 + $0x68] sm:$0xf]
        %v340 = vld [vmem:[%s208 + $0x6c] sm:$0xf]
        %v341 = vld [vmem:[%s208 + $0x70] sm:$0xf]
        %v342 = vld [vmem:[%s208 + $0x74] sm:$0xf]
        %v343 = vld [vmem:[%s208 + $0x78] sm:$0xf]
        %v344 = vld [vmem:[%s208 + $0x7c] sm:$0xf]
        %v345 = vld [vmem:[#allocation6] sm:$0xf]
        %v346 = vld [vmem:[#allocation6 + $0x4] sm:$0xf]
        %v347 = vld [vmem:[#allocation6 + $0x8] sm:$0xf]
        %v348 = vld [vmem:[#allocation6 + $0xc] sm:$0xf]
        %v349 = vld [vmem:[#allocation6 + $0x10] sm:$0xf]
        %v350 = vld [vmem:[#allocation6 + $0x14] sm:$0xf]
        %v351 = vld [vmem:[#allocation6 + $0x18] sm:$0xf]
        %v352 = vld [vmem:[#allocation6 + $0x1c] sm:$0xf]
        %v353 = vld [vmem:[#allocation6 + $0x20] sm:$0xf]
        %v354 = vld [vmem:[#allocation6 + $0x24] sm:$0xf]
        %v355 = vld [vmem:[#allocation6 + $0x28] sm:$0xf]
        %v356 = vld [vmem:[#allocation6 + $0x2c] sm:$0xf]
        %v357 = vld [vmem:[#allocation6 + $0x30] sm:$0xf]
        %v358 = vld [vmem:[#allocation6 + $0x34] sm:$0xf]
        %v359 = vld [vmem:[#allocation6 + $0x38] sm:$0xf]
        %v360 = vld [vmem:[#allocation6 + $0x3c] sm:$0xf]
        %v393 = vunpack.c.l.b16 %v313
        %v394 = vunpack.c.l.b16 %v314
        %v395 = vunpack.c.l.b16 %v315
        %v396 = vunpack.c.l.b16 %v316
        %v397 = vunpack.c.l.b16 %v317
        %v398 = vunpack.c.l.b16 %v318
        %v399 = vunpack.c.l.b16 %v319
        %v400 = vunpack.c.l.b16 %v320
        %v401 = vunpack.c.l.b16 %v321
        %v402 = vunpack.c.l.b16 %v322
        %v403 = vunpack.c.l.b16 %v323
        %v404 = vunpack.c.l.b16 %v324
        %v405 = vunpack.c.l.b16 %v325
        %v406 = vunpack.c.l.b16 %v326
        %v407 = vunpack.c.l.b16 %v327
        %v408 = vunpack.c.l.b16 %v328
        %v409 = vunpack.c.l.b16 %v329
        %v410 = vunpack.c.l.b16 %v330
        %v411 = vunpack.c.l.b16 %v331
        %v412 = vunpack.c.l.b16 %v332
        %v413 = vunpack.c.l.b16 %v333
        %v414 = vunpack.c.l.b16 %v334
        %v415 = vunpack.c.l.b16 %v335
        %v416 = vunpack.c.l.b16 %v336
        %v417 = vunpack.c.l.b16 %v337
        %v418 = vunpack.c.l.b16 %v338
        %v419 = vunpack.c.l.b16 %v339
        %v420 = vunpack.c.l.b16 %v340
        %v421 = vunpack.c.l.b16 %v341
        %v422 = vunpack.c.l.b16 %v342
        %v423 = vunpack.c.l.b16 %v343
        %v424 = vunpack.c.l.b16 %v344
        %v425 = vpack.c.b16 %v394, %v393
        %v426 = vpack.c.b16 %v396, %v395
        %v427 = vpack.c.b16 %v398, %v397
        %v428 = vpack.c.b16 %v400, %v399
        %v429 = vpack.c.b16 %v402, %v401
        %v430 = vpack.c.b16 %v404, %v403
        %v431 = vpack.c.b16 %v406, %v405
        %v432 = vpack.c.b16 %v408, %v407
        %v433 = vpack.c.b16 %v410, %v409
        %v434 = vpack.c.b16 %v412, %v411
        %v435 = vpack.c.b16 %v414, %v413
        %v436 = vpack.c.b16 %v416, %v415
        %v437 = vpack.c.b16 %v418, %v417
        %v438 = vpack.c.b16 %v420, %v419
        %v439 = vpack.c.b16 %v422, %v421
        %v440 = vpack.c.b16 %v424, %v423
        %v473 = vunpack.c.l.b16 %v345
        %v474 = vunpack.c.l.b16 %v346
        %v475 = vunpack.c.l.b16 %v347
        %v476 = vunpack.c.l.b16 %v348
        %v477 = vunpack.c.l.b16 %v349
        %v478 = vunpack.c.l.b16 %v350
        %v479 = vunpack.c.l.b16 %v351
        %v480 = vunpack.c.l.b16 %v352
        %v481 = vunpack.c.l.b16 %v353
        %v482 = vunpack.c.l.b16 %v354
        %v483 = vunpack.c.l.b16 %v355
        %v484 = vunpack.c.l.b16 %v356
        %v485 = vunpack.c.l.b16 %v357
        %v486 = vunpack.c.l.b16 %v358
        %v487 = vunpack.c.l.b16 %v359
        %v488 = vunpack.c.l.b16 %v360
        %v489 = vpack.c.b16 %v474, %v473
        %v490 = vpack.c.b16 %v476, %v475
        %v491 = vpack.c.b16 %v478, %v477
        %v492 = vpack.c.b16 %v480, %v479
        %v493 = vpack.c.b16 %v482, %v481
        %v494 = vpack.c.b16 %v484, %v483
        %v495 = vpack.c.b16 %v486, %v485
        %v496 = vpack.c.b16 %v488, %v487
        %505 = vmatpush.bf16.msra.mxu0 %v496
        %506 = vmatpush.bf16.msra.mxu0 %v495
        %507 = vmatpush.bf16.msra.mxu0 %v494
        %508 = vmatpush.bf16.msra.mxu0 %v493
        %509 = vmatpush.bf16.msra.mxu0 %v492
        %510 = vmatpush.bf16.msra.mxu0 %v491
        %511 = vmatpush.bf16.msra.mxu0 %v490
        %512 = vmatpush.bf16.msra.mxu0 %v489
        %513 = vmatmul.bf16.gmra.mxu0 %v425
        %v514 = vpop.f32.mrf.mxu0
        %v515 = vadd.f32 0.0, %v514
        %v516 = vpop.f32.mrf.mxu0
        %v517 = vadd.f32 0.0, %v516
        %518 = vmatmul.bf16.gmra.mxu0 %v426
        %v519 = vpop.f32.mrf.mxu0
        %v520 = vadd.f32 0.0, %v519
        %v521 = vpop.f32.mrf.mxu0
        %v522 = vadd.f32 0.0, %v521
        %523 = vmatmul.bf16.gmra.mxu0 %v427
        %v524 = vpop.f32.mrf.mxu0
        %v525 = vadd.f32 0.0, %v524
        %v526 = vpop.f32.mrf.mxu0
        %v527 = vadd.f32 0.0, %v526
        %528 = vmatmul.bf16.gmra.mxu0 %v428
        %v529 = vpop.f32.mrf.mxu0
        %v530 = vadd.f32 0.0, %v529
        %v531 = vpop.f32.mrf.mxu0
        %v532 = vadd.f32 0.0, %v531
        %533 = vmatmul.bf16.gmra.mxu0 %v429
        %v534 = vpop.f32.mrf.mxu0
        %v535 = vadd.f32 0.0, %v534
        %v536 = vpop.f32.mrf.mxu0
        %v537 = vadd.f32 0.0, %v536
        %538 = vmatmul.bf16.gmra.mxu0 %v430
        %v539 = vpop.f32.mrf.mxu0
        %v540 = vadd.f32 0.0, %v539
        %v541 = vpop.f32.mrf.mxu0
        %v542 = vadd.f32 0.0, %v541
        %543 = vmatmul.bf16.gmra.mxu0 %v431
        %v544 = vpop.f32.mrf.mxu0
        %v545 = vadd.f32 0.0, %v544
        %v546 = vpop.f32.mrf.mxu0
        %v547 = vadd.f32 0.0, %v546
        %548 = vmatmul.bf16.gmra.mxu0 %v432
        %v549 = vpop.f32.mrf.mxu0
        %v550 = vadd.f32 0.0, %v549
        %v551 = vpop.f32.mrf.mxu0
        %v552 = vadd.f32 0.0, %v551
        %553 = vmatmul.bf16.gmra.mxu0 %v433
        %v554 = vpop.f32.mrf.mxu0
        %v555 = vadd.f32 0.0, %v554
        %v556 = vpop.f32.mrf.mxu0
        %v557 = vadd.f32 0.0, %v556
        %558 = vmatmul.bf16.gmra.mxu0 %v434
        %v559 = vpop.f32.mrf.mxu0
        %v560 = vadd.f32 0.0, %v559
        %v561 = vpop.f32.mrf.mxu0
        %v562 = vadd.f32 0.0, %v561
        %563 = vmatmul.bf16.gmra.mxu0 %v435
        %v564 = vpop.f32.mrf.mxu0
        %v565 = vadd.f32 0.0, %v564
        %v566 = vpop.f32.mrf.mxu0
        %v567 = vadd.f32 0.0, %v566
        %568 = vmatmul.bf16.gmra.mxu0 %v436
        %v569 = vpop.f32.mrf.mxu0
        %v570 = vadd.f32 0.0, %v569
        %v571 = vpop.f32.mrf.mxu0
        %v572 = vadd.f32 0.0, %v571
        %573 = vmatmul.bf16.gmra.mxu0 %v437
        %v574 = vpop.f32.mrf.mxu0
        %v575 = vadd.f32 0.0, %v574
        %v576 = vpop.f32.mrf.mxu0
        %v577 = vadd.f32 0.0, %v576
        %578 = vmatmul.bf16.gmra.mxu0 %v438
        %v579 = vpop.f32.mrf.mxu0
        %v580 = vadd.f32 0.0, %v579
        %v581 = vpop.f32.mrf.mxu0
        %v582 = vadd.f32 0.0, %v581
        %583 = vmatmul.bf16.gmra.mxu0 %v439
        %v584 = vpop.f32.mrf.mxu0
        %v585 = vadd.f32 0.0, %v584
        %v586 = vpop.f32.mrf.mxu0
        %v587 = vadd.f32 0.0, %v586
        %588 = vmatmul.bf16.gmra.mxu0 %v440
        %v589 = vpop.f32.mrf.mxu0
        %v590 = vadd.f32 0.0, %v589
        %v591 = vpop.f32.mrf.mxu0
        %v592 = vadd.f32 0.0, %v591
        %593 = vdwg.mxu0
        %v594 = vadd.f32 %v281, %v515
        %v595 = vadd.f32 %v282, %v517
        %v596 = vadd.f32 %v283, %v520
        %v597 = vadd.f32 %v284, %v522
        %v598 = vadd.f32 %v285, %v525
        %v599 = vadd.f32 %v286, %v527
        %v600 = vadd.f32 %v287, %v530
        %v601 = vadd.f32 %v288, %v532
        %v602 = vadd.f32 %v289, %v535
        %v603 = vadd.f32 %v290, %v537
        %v604 = vadd.f32 %v291, %v540
        %v605 = vadd.f32 %v292, %v542
        %v606 = vadd.f32 %v293, %v545
        %v607 = vadd.f32 %v294, %v547
        %v608 = vadd.f32 %v295, %v550
        %v609 = vadd.f32 %v296, %v552
        %v610 = vadd.f32 %v297, %v555
        %v611 = vadd.f32 %v298, %v557
        %v612 = vadd.f32 %v299, %v560
        %v613 = vadd.f32 %v300, %v562
        %v614 = vadd.f32 %v301, %v565
        %v615 = vadd.f32 %v302, %v567
        %v616 = vadd.f32 %v303, %v570
        %v617 = vadd.f32 %v304, %v572
        %v618 = vadd.f32 %v305, %v575
        %v619 = vadd.f32 %v306, %v577
        %v620 = vadd.f32 %v307, %v580
        %v621 = vadd.f32 %v308, %v582
        %v622 = vadd.f32 %v309, %v585
        %v623 = vadd.f32 %v310, %v587
        %v624 = vadd.f32 %v311, %v590
        %v625 = vadd.f32 %v312, %v592
        %626 = vst [vmem:[#allocation2] sm:$0xff] %v594
        %627 = vst [vmem:[#allocation2 + $0x8] sm:$0xff] %v595
        %628 = vst [vmem:[#allocation2 + $0x10] sm:$0xff] %v596
        %629 = vst [vmem:[#allocation2 + $0x18] sm:$0xff] %v597
        %630 = vst [vmem:[#allocation2 + $0x20] sm:$0xff] %v598
        %631 = vst [vmem:[#allocation2 + $0x28] sm:$0xff] %v599
        %632 = vst [vmem:[#allocation2 + $0x30] sm:$0xff] %v600
        %633 = vst [vmem:[#allocation2 + $0x38] sm:$0xff] %v601
        %634 = vst [vmem:[#allocation2 + $0x40] sm:$0xff] %v602
        %635 = vst [vmem:[#allocation2 + $0x48] sm:$0xff] %v603
        %636 = vst [vmem:[#allocation2 + $0x50] sm:$0xff] %v604
        %637 = vst [vmem:[#allocation2 + $0x58] sm:$0xff] %v605
        %638 = vst [vmem:[#allocation2 + $0x60] sm:$0xff] %v606
        %639 = vst [vmem:[#allocation2 + $0x68] sm:$0xff] %v607
        %640 = vst [vmem:[#allocation2 + $0x70] sm:$0xff] %v608
        %641 = vst [vmem:[#allocation2 + $0x78] sm:$0xff] %v609
        %642 = vst [vmem:[#allocation2 + $0x80] sm:$0xff] %v610
        %643 = vst [vmem:[#allocation2 + $0x88] sm:$0xff] %v611
        %644 = vst [vmem:[#allocation2 + $0x90] sm:$0xff] %v612
        %645 = vst [vmem:[#allocation2 + $0x98] sm:$0xff] %v613
        %646 = vst [vmem:[#allocation2 + $0xa0] sm:$0xff] %v614
        %647 = vst [vmem:[#allocation2 + $0xa8] sm:$0xff] %v615
        %648 = vst [vmem:[#allocation2 + $0xb0] sm:$0xff] %v616
        %649 = vst [vmem:[#allocation2 + $0xb8] sm:$0xff] %v617
        %650 = vst [vmem:[#allocation2 + $0xc0] sm:$0xff] %v618
        %651 = vst [vmem:[#allocation2 + $0xc8] sm:$0xff] %v619
        %652 = vst [vmem:[#allocation2 + $0xd0] sm:$0xff] %v620
        %653 = vst [vmem:[#allocation2 + $0xd8] sm:$0xff] %v621
        %654 = vst [vmem:[#allocation2 + $0xe0] sm:$0xff] %v622
        %655 = vst [vmem:[#allocation2 + $0xe8] sm:$0xff] %v623
        %656 = vst [vmem:[#allocation2 + $0xf0] sm:$0xff] %v624
        %657 = vst [vmem:[#allocation2 + $0xf8] sm:$0xff] %v625
        // Predicated region
        $region41: #{tpu_custom_call.1} parent=27 // pred_check
          %p658 = pneg %p245
        $region42: #{tpu_custom_call.1} parent=27 // pred_check_branch
          %660 = sbr.rel (%p658) target = $region44
        $region43: #{tpu_custom_call.1} parent=27 // pred_region
          %v661 = vld [vmem:[#allocation2] sm:$0xff]
          %v662 = vld [vmem:[#allocation2 + $0x8] sm:$0xff]
          %v663 = vld [vmem:[#allocation2 + $0x10] sm:$0xff]
          %v664 = vld [vmem:[#allocation2 + $0x18] sm:$0xff]
          %v665 = vld [vmem:[#allocation2 + $0x20] sm:$0xff]
          %v666 = vld [vmem:[#allocation2 + $0x28] sm:$0xff]
          %v667 = vld [vmem:[#allocation2 + $0x30] sm:$0xff]
          %v668 = vld [vmem:[#allocation2 + $0x38] sm:$0xff]
          %v669 = vld [vmem:[#allocation2 + $0x40] sm:$0xff]
          %v670 = vld [vmem:[#allocation2 + $0x48] sm:$0xff]
          %v671 = vld [vmem:[#allocation2 + $0x50] sm:$0xff]
          %v672 = vld [vmem:[#allocation2 + $0x58] sm:$0xff]
          %v673 = vld [vmem:[#allocation2 + $0x60] sm:$0xff]
          %v674 = vld [vmem:[#allocation2 + $0x68] sm:$0xff]
          %v675 = vld [vmem:[#allocation2 + $0x70] sm:$0xff]
          %v676 = vld [vmem:[#allocation2 + $0x78] sm:$0xff]
          %v677 = vld [vmem:[#allocation2 + $0x80] sm:$0xff]
          %v678 = vld [vmem:[#allocation2 + $0x88] sm:$0xff]
          %v679 = vld [vmem:[#allocation2 + $0x90] sm:$0xff]
          %v680 = vld [vmem:[#allocation2 + $0x98] sm:$0xff]
          %v681 = vld [vmem:[#allocation2 + $0xa0] sm:$0xff]
          %v682 = vld [vmem:[#allocation2 + $0xa8] sm:$0xff]
          %v683 = vld [vmem:[#allocation2 + $0xb0] sm:$0xff]
          %v684 = vld [vmem:[#allocation2 + $0xb8] sm:$0xff]
          %v685 = vld [vmem:[#allocation2 + $0xc0] sm:$0xff]
          %v686 = vld [vmem:[#allocation2 + $0xc8] sm:$0xff]
          %v687 = vld [vmem:[#allocation2 + $0xd0] sm:$0xff]
          %v688 = vld [vmem:[#allocation2 + $0xd8] sm:$0xff]
          %v689 = vld [vmem:[#allocation2 + $0xe0] sm:$0xff]
          %v690 = vld [vmem:[#allocation2 + $0xe8] sm:$0xff]
          %v691 = vld [vmem:[#allocation2 + $0xf0] sm:$0xff]
          %v692 = vld [vmem:[#allocation2 + $0xf8] sm:$0xff]
          %693 = vst [vmem:[%s234] sm:$0xff] %v661
          %694 = vst [vmem:[%s234 + $0x8] sm:$0xff] %v662
          %695 = vst [vmem:[%s234 + $0x10] sm:$0xff] %v663
          %696 = vst [vmem:[%s234 + $0x18] sm:$0xff] %v664
          %697 = vst [vmem:[%s234 + $0x20] sm:$0xff] %v665
          %698 = vst [vmem:[%s234 + $0x28] sm:$0xff] %v666
          %699 = vst [vmem:[%s234 + $0x30] sm:$0xff] %v667
          %700 = vst [vmem:[%s234 + $0x38] sm:$0xff] %v668
          %701 = vst [vmem:[%s234 + $0x40] sm:$0xff] %v669
          %702 = vst [vmem:[%s234 + $0x48] sm:$0xff] %v670
          %703 = vst [vmem:[%s234 + $0x50] sm:$0xff] %v671
          %704 = vst [vmem:[%s234 + $0x58] sm:$0xff] %v672
          %705 = vst [vmem:[%s234 + $0x60] sm:$0xff] %v673
          %706 = vst [vmem:[%s234 + $0x68] sm:$0xff] %v674
          %707 = vst [vmem:[%s234 + $0x70] sm:$0xff] %v675
          %708 = vst [vmem:[%s234 + $0x78] sm:$0xff] %v676
          %709 = vst [vmem:[%s234 + $0x80] sm:$0xff] %v677
          %710 = vst [vmem:[%s234 + $0x88] sm:$0xff] %v678
          %711 = vst [vmem:[%s234 + $0x90] sm:$0xff] %v679
          %712 = vst [vmem:[%s234 + $0x98] sm:$0xff] %v680
          %713 = vst [vmem:[%s234 + $0xa0] sm:$0xff] %v681
          %714 = vst [vmem:[%s234 + $0xa8] sm:$0xff] %v682
          %715 = vst [vmem:[%s234 + $0xb0] sm:$0xff] %v683
          %716 = vst [vmem:[%s234 + $0xb8] sm:$0xff] %v684
          %717 = vst [vmem:[%s234 + $0xc0] sm:$0xff] %v685
          %718 = vst [vmem:[%s234 + $0xc8] sm:$0xff] %v686
          %719 = vst [vmem:[%s234 + $0xd0] sm:$0xff] %v687
          %720 = vst [vmem:[%s234 + $0xd8] sm:$0xff] %v688
          %721 = vst [vmem:[%s234 + $0xe0] sm:$0xff] %v689
          %722 = vst [vmem:[%s234 + $0xe8] sm:$0xff] %v690
          %723 = vst [vmem:[%s234 + $0xf0] sm:$0xff] %v691
          %724 = vst [vmem:[%s234 + $0xf8] sm:$0xff] %v692
          %v725 = vadd.f32 %v661, %v662
          %v726 = vadd.f32 %v725, %v663
          %v727 = vadd.f32 %v726, %v664
          %v728 = vadd.f32 %v727, %v665
          %v729 = vadd.f32 %v728, %v666
          %v730 = vadd.f32 %v729, %v667
          %v731 = vadd.f32 %v730, %v668
          %v732 = vadd.f32 %v731, %v669
          %v733 = vadd.f32 %v732, %v670
          %v734 = vadd.f32 %v733, %v671
          %v735 = vadd.f32 %v734, %v672
          %v736 = vadd.f32 %v735, %v673
          %v737 = vadd.f32 %v736, %v674
          %v738 = vadd.f32 %v737, %v675
          %v739 = vadd.f32 %v738, %v676
          %v740 = vadd.f32 %v739, %v677
          %v741 = vadd.f32 %v740, %v678
          %v742 = vadd.f32 %v741, %v679
          %v743 = vadd.f32 %v742, %v680
          %v744 = vadd.f32 %v743, %v681
          %v745 = vadd.f32 %v744, %v682
          %v746 = vadd.f32 %v745, %v683
          %v747 = vadd.f32 %v746, %v684
          %v748 = vadd.f32 %v747, %v685
          %v749 = vadd.f32 %v748, %v686
          %v750 = vadd.f32 %v749, %v687
          %v751 = vadd.f32 %v750, %v688
          %v752 = vadd.f32 %v751, %v689
          %v753 = vadd.f32 %v752, %v690
          %v754 = vadd.f32 %v753, %v691
          %v755 = vadd.f32 %v754, %v692
          %v756 = vrot.slane %v755, 4
          %v757 = vadd.f32 %v755, %v756
          %v758 = vrot.slane %v757, 2
          %v759 = vadd.f32 %v757, %v758
          %v760 = vrot.slane %v759, 1
          %v761 = vadd.f32 %v759, %v760
          %v762 = vmul.f32 %v661, %v661
          %v763 = vmul.f32 %v662, %v662
          %v764 = vmul.f32 %v663, %v663
          %v765 = vmul.f32 %v664, %v664
          %v766 = vmul.f32 %v665, %v665
          %v767 = vmul.f32 %v666, %v666
          %v768 = vmul.f32 %v667, %v667
          %v769 = vmul.f32 %v668, %v668
          %v770 = vmul.f32 %v669, %v669
          %v771 = vmul.f32 %v670, %v670
          %v772 = vmul.f32 %v671, %v671
          %v773 = vmul.f32 %v672, %v672
          %v774 = vmul.f32 %v673, %v673
          %v775 = vmul.f32 %v674, %v674
          %v776 = vmul.f32 %v675, %v675
          %v777 = vmul.f32 %v676, %v676
          %v778 = vmul.f32 %v677, %v677
          %v779 = vmul.f32 %v678, %v678
          %v780 = vmul.f32 %v679, %v679
          %v781 = vmul.f32 %v680, %v680
          %v782 = vmul.f32 %v681, %v681
          %v783 = vmul.f32 %v682, %v682
          %v784 = vmul.f32 %v683, %v683
          %v785 = vmul.f32 %v684, %v684
          %v786 = vmul.f32 %v685, %v685
          %v787 = vmul.f32 %v686, %v686
          %v788 = vmul.f32 %v687, %v687
          %v789 = vmul.f32 %v688, %v688
          %v790 = vmul.f32 %v689, %v689
          %v791 = vmul.f32 %v690, %v690
          %v792 = vmul.f32 %v691, %v691
          %v793 = vmul.f32 %v692, %v692
          %v794 = vadd.f32 %v762, %v763
          %v795 = vadd.f32 %v794, %v764
          %v796 = vadd.f32 %v795, %v765
          %v797 = vadd.f32 %v796, %v766
          %v798 = vadd.f32 %v797, %v767
          %v799 = vadd.f32 %v798, %v768
          %v800 = vadd.f32 %v799, %v769
          %v801 = vadd.f32 %v800, %v770
          %v802 = vadd.f32 %v801, %v771
          %v803 = vadd.f32 %v802, %v772
          %v804 = vadd.f32 %v803, %v773
          %v805 = vadd.f32 %v804, %v774
          %v806 = vadd.f32 %v805, %v775
          %v807 = vadd.f32 %v806, %v776
          %v808 = vadd.f32 %v807, %v777
          %v809 = vadd.f32 %v808, %v778
          %v810 = vadd.f32 %v809, %v779
          %v811 = vadd.f32 %v810, %v780
          %v812 = vadd.f32 %v811, %v781
          %v813 = vadd.f32 %v812, %v782
          %v814 = vadd.f32 %v813, %v783
          %v815 = vadd.f32 %v814, %v784
          %v816 = vadd.f32 %v815, %v785
          %v817 = vadd.f32 %v816, %v786
          %v818 = vadd.f32 %v817, %v787
          %v819 = vadd.f32 %v818, %v788
          %v820 = vadd.f32 %v819, %v789
          %v821 = vadd.f32 %v820, %v790
          %v822 = vadd.f32 %v821, %v791
          %v823 = vadd.f32 %v822, %v792
          %v824 = vadd.f32 %v823, %v793
          %v825 = vrot.slane %v824, 4
          %v826 = vadd.f32 %v824, %v825
          %v827 = vrot.slane %v826, 2
          %v828 = vadd.f32 %v826, %v827
          %v829 = vrot.slane %v828, 1
          %v830 = vadd.f32 %v828, %v829
          %v831 = vlaneseq
          %v832 = vshrl.u32 %v831, 7
          %vm833 = vcmp.lt.s32.totalorder %v832, 4
          %v834 = vsel %vm833, %v761, %v830
          %835 = vst [vmem:[%s241] sm:$0xff] %v834
        $region44: #{tpu_custom_call.1} parent=27 // pred_fallthru
          _
        %s836 = sand.u32 %s99, 1
        %s837 = scalar_lea.sflag [#allocation5], %s836
        %s838 = sand.u32 %s99, 1
        %s839 = smul.addr %s838, 256
        %s840 = scalar_lea.vmem [#allocation8], %s839
        %s841 = sand.u32 %s125, 1
        %s842 = scalar_lea.sflag [#allocation10], %s841
        %s843 = sand.u32 %s125, 1
        %s844 = smul.addr %s843, 8
        %s845 = scalar_lea.vmem [#allocation9], %s844
        // Predicated region
        $region45: #{tpu_custom_call.1} parent=27 // pred_check
          %p846 = pneg %p109
        $region46: #{tpu_custom_call.1} parent=27 // pred_check_branch
          %848 = sbr.rel (%p846) target = $region48
        $region47: #{tpu_custom_call.1} parent=27 // pred_region
          %s849 = smul.u32 32, %s29
          %851 = vsyncadd %s837, 0
          %s852 = smul.addr %s849, 8
          %s853 = scalar_lea.hbm %s2, %s852
          %s854 = sshll.u32 %s840, 4
          %s855 = int_to_ptr.vmem [resolvable:$true] %s854
          %s856 = sshll.u32 %s853, 4
          %s857 = int_to_ptr.hbm [resolvable:$true] %s856
          %862 = dma.vmem_to_hbm [thread:$0]  %s855, 4096, %s857, %s837, 128, 128, 8
        $region48: #{tpu_custom_call.1} parent=27 // pred_fallthru
          _
        // Predicated region
        $region49: #{tpu_custom_call.1} parent=27 // pred_check
          %p863 = pneg %p135
        $region50: #{tpu_custom_call.1} parent=27 // pred_check_branch
          %865 = sbr.rel (%p863) target = $region52
        $region51: #{tpu_custom_call.1} parent=27 // pred_region
          %867 = vsyncadd %s842, 0
          %s868 = smul.addr %s29, 8
          %s869 = scalar_lea.hbm %s3, %s868
          %s871 = sshll.u32 %s845, 4
          %s872 = int_to_ptr.vmem [resolvable:$true] %s871
          %s873 = sshll.u32 %s869, 4
          %s874 = int_to_ptr.hbm [resolvable:$true] %s873
          %876 = dma.vmem_to_hbm [thread:$0]  %s872, 128, %s874, %s842
        $region52: #{tpu_custom_call.1} parent=27 // pred_fallthru
          _
      $region28: #{tpu_custom_call.1} parent=5 // pred_fallthru
        _
      %p877 = scmp.le.s32.totalorder 2, %s20
      // Predicated region
      $region53: #{tpu_custom_call.1} parent=5 // pred_check
        %p878 = pneg %p877
      $region54: #{tpu_custom_call.1} parent=5 // pred_check_branch
        %880 = sbr.rel (%p878) target = $region56
      $region55: #{tpu_custom_call.1} parent=5 // pred_region
        %s881 = ssub.s32 %s20, 2
        // Predicated region
        $region57: #{tpu_custom_call.1} parent=55 // pred_check
          %p882 = pneg %p115
        $region58: #{tpu_custom_call.1} parent=55 // pred_check_branch
          %884 = sbr.rel (%p882) target = $region60
        $region59: #{tpu_custom_call.1} parent=55 // pred_region
          %s885 = sand.u32 %s100, 1
          %s886 = scalar_lea.sflag [#allocation5], %s885
          %s887 = sand.u32 %s100, 1
          %s888 = smul.addr %s887, 256
          %s889 = scalar_lea.vmem [#allocation8], %s888
          %891 = dma.done %s886, 4096
        $region60: #{tpu_custom_call.1} parent=55 // pred_fallthru
          _
        // Predicated region
        $region61: #{tpu_custom_call.1} parent=55 // pred_check
          %p892 = pneg %p141
        $region62: #{tpu_custom_call.1} parent=55 // pred_check_branch
          %894 = sbr.rel (%p892) target = $region64
        $region63: #{tpu_custom_call.1} parent=55 // pred_region
          %s895 = sand.u32 %s126, 1
          %s896 = scalar_lea.sflag [#allocation10], %s895
          %s897 = sand.u32 %s126, 1
          %s898 = smul.addr %s897, 8
          %s899 = scalar_lea.vmem [#allocation9], %s898
          %901 = dma.done %s896, 128
        $region64: #{tpu_custom_call.1} parent=55 // pred_fallthru
          _
      $region56: #{tpu_custom_call.1} parent=5 // pred_fallthru
        _
    $region6: #{tpu_custom_call.1} parent=1 // loop_footer
      %s24 = sadd.s32 1, %s20
    $region7: #{tpu_custom_call.1} parent=1 // loop_footer_branch
      %19 = sbr.rel target = $region3
    $region8: #{tpu_custom_call.1} parent=1 // loop_exit
      _
    %902 = vsyncpa [#allocation4], 1
    %s903 = scalar_lea.sflag [#allocation4], 1
    %904 = vsyncpa %s903, 1
    %905 = vsyncpa [#allocation7], 1
    %906 = vsyncpa [#allocation5], 1
    %s907 = scalar_lea.sflag [#allocation5], 1
    %908 = vsyncpa %s907, 1
    %909 = vsyncpa [#allocation10], 1
    %s910 = scalar_lea.sflag [#allocation10], 1
    %911 = vsyncpa %s910, 1

</llo_original>
